<compile_context>
chip_gen: v7x
topology: tpu7x:2x2x1
jax: 0.10.0
libtpu: 0.0.40
codegen_flags: <defaults>
</compile_context>

<pallas_src>
import functools

import jax
import jax.numpy as jnp
from jax import lax
from jax.experimental import pallas as pl
from jax.experimental.pallas import tpu as pltpu


_ACTIVATIONS = {
    "relu": lambda y: jnp.maximum(y, 0.0),
    "tanh": jnp.tanh,
    "sigmoid": jax.nn.sigmoid,
    "gelu": jax.nn.gelu,
    "identity": lambda y: y,
}


def _fused_kernel(act_fn, x_ref, w_ref, b_ref, o_ref):
    """Single-K-step path: y = act(x @ W.T + b) in one shot (no scratch, no revisit).

    x_ref : (tm, K)   input tile           (block index (i, 0))
    w_ref : (tn, K)   weight tile (PT layout), block index (j, 0)
    b_ref : (1, tn)   bias tile            (block index (0, j))
    o_ref : (tm, tn)  output tile          (block index (i, j))
    """
    y = lax.dot_general(
        x_ref[...], w_ref[...],
        dimension_numbers=(((1,), (1,)), ((), ())),   # x @ W.T on the MXU
        preferred_element_type=jnp.float32,
    )
    y = y + b_ref[...].astype(jnp.float32)
    o_ref[...] = act_fn(y).astype(o_ref.dtype)


def _accum_kernel(act_fn, x_ref, w_ref, b_ref, o_ref, acc_ref):
    """Multi-K-step path: accumulate in f32 scratch, fuse bias+act on the last K step.

    x_ref  : (tm, tk)  block index (i, k)
    w_ref  : (tn, tk)  block index (j, k)
    b_ref  : (1, tn)   block index (0, j)
    o_ref  : (tm, tn)  block index (i, j)  (resident across k)
    acc_ref: (tm, tn)  f32 accumulator scratch
    """
    k = pl.program_id(2)

    @pl.when(k == 0)
    def _():
        acc_ref[...] = jnp.zeros_like(acc_ref)

    acc_ref[...] += lax.dot_general(
        x_ref[...], w_ref[...],
        dimension_numbers=(((1,), (1,)), ((), ())),
        preferred_element_type=jnp.float32,
    )

    # Bias + activation + store only once, on the final K step (lane-dense,
    # unmasked writeback; no partial pre-activation results hit the output).
    @pl.when(k == pl.num_programs(2) - 1)
    def _():
        y = acc_ref[...] + b_ref[...].astype(jnp.float32)
        o_ref[...] = act_fn(y).astype(o_ref.dtype)


def _largest_divisor_tile(dim, step, cap):
    """Largest multiple of `step` that divides `dim`, capped at `cap`; else the full dim."""
    best = None
    t = step
    top = min(dim, cap)
    while t <= top:
        if dim % t == 0:
            best = t
        t += step
    return best if best is not None else dim


@functools.partial(jax.jit, static_argnames=("act",))
def single_layer(x, w, b, act="relu"):
    """y = act(x @ w.T + b), matching nn.Linear(dim, dim) + activation."""
    act_fn = _ACTIVATIONS[act]

    orig_shape = x.shape
    dim = orig_shape[-1]
    assert w.shape == (dim, dim) and b.shape == (dim,)
    x2 = x.reshape(-1, dim)                    # Linear applies over the last dim
    batch = x2.shape[0]
    b2 = b.reshape(1, dim)                     # 2-D, lane-major bias row

    # Lane/MXU-friendly tiles: tm multiple of 8, tn/tk multiples of 128
    # (falling back to the full dim for small / odd shapes, which BlockSpec allows).
    # With tm<=256, tn<=512, tk<=512 the double-buffered footprint stays well under
    # the 16 MiB scoped-VMEM default (v5e), hence also fits v6e (32) and v7x (32).
    tm = _largest_divisor_tile(batch, 8, 256)
    tn = _largest_divisor_tile(dim, 128, 512)
    tk = _largest_divisor_tile(dim, 128, 512)

    n_i, n_j, n_k = batch // tm, dim // tn, dim // tk

    itemsize = jnp.dtype(x.dtype).itemsize
    cost = pl.CostEstimate(
        flops=2 * batch * dim * dim,
        transcendentals=0,
        bytes_accessed=(n_j * batch * dim      # x streamed once per output-col block
                        + n_i * dim * dim      # W streamed once per output-row block
                        + dim                  # bias read
                        + batch * dim          # y write
                        ) * itemsize,
    )

    if n_k == 1:
        # Whole K fits a single tile: 2-D grid, no accumulator scratch.
        grid = (n_i, n_j)
        kernel = functools.partial(_fused_kernel, act_fn)
        in_specs = [
            pl.BlockSpec((tm, dim), lambda i, j: (i, 0)),   # x tile
            pl.BlockSpec((tn, dim), lambda i, j: (j, 0)),   # W tile (PyTorch layout)
            pl.BlockSpec((1, tn), lambda i, j: (0, j)),     # bias tile
        ]
        out_specs = pl.BlockSpec((tm, tn), lambda i, j: (i, j))
        scratch_shapes = []
        dim_sem = ("parallel", "parallel")
    else:
        grid = (n_i, n_j, n_k)
        kernel = functools.partial(_accum_kernel, act_fn)
        in_specs = [
            pl.BlockSpec((tm, tk), lambda i, j, k: (i, k)),   # x tile
            pl.BlockSpec((tn, tk), lambda i, j, k: (j, k)),   # W tile (PyTorch layout)
            pl.BlockSpec((1, tn), lambda i, j, k: (0, j)),    # bias tile
        ]
        out_specs = pl.BlockSpec((tm, tn), lambda i, j, k: (i, j))
        scratch_shapes = [pltpu.VMEM((tm, tn), jnp.float32)]
        # M/N axes shard across v7x's two TensorCores; K is the reduction axis.
        dim_sem = ("parallel", "parallel", "arbitrary")

    out = pl.pallas_call(
        kernel,
        out_shape=jax.ShapeDtypeStruct((batch, dim), x.dtype),
        grid_spec=pltpu.PrefetchScalarGridSpec(
            num_scalar_prefetch=0,
            grid=grid,
            in_specs=in_specs,
            out_specs=out_specs,
            scratch_shapes=scratch_shapes,
        ),
        compiler_params=pltpu.CompilerParams(dimension_semantics=dim_sem),
        cost_estimate=cost,
    )(x2, w, b2)

    return out.reshape(orig_shape)


def reference(x, w, b, act="relu"):
    y = jnp.dot(x, w.T, precision=lax.Precision.HIGHEST) + b
    return _ACTIVATIONS[act](y)


def _make_params(key, dim, dtype=jnp.float32):
    kw, kb = jax.random.split(key)
    bound = 1.0 / (dim ** 0.5)          # mimic nn.Linear's uniform init range
    w = jax.random.uniform(kw, (dim, dim), minval=-bound, maxval=bound, dtype=dtype)
    b = jax.random.uniform(kb, (dim,), minval=-bound, maxval=bound, dtype=dtype)
    return w, b


if __name__ == "__main__":
    key = jax.random.PRNGKey(0)
    k1, k2, k3, k4 = jax.random.split(key, 4)

    # Case 1: small 128-aligned shape — hits the single-K fast path (no scratch).
    batch1, dim1 = 16, 384
    x1 = jax.random.normal(k1, (batch1, dim1), dtype=jnp.float32)
    w1, b1 = _make_params(k2, dim1)
    y1 = jax.block_until_ready(single_layer(x1, w1, b1, act="relu"))
    assert y1.shape == (batch1, dim1)
    assert jnp.allclose(y1, reference(x1, w1, b1, "relu"), atol=5e-4, rtol=5e-4), \
        "relu single-K mismatch vs reference"

    # Case 2: larger dim — exercises the tiled (i, j, k) grid, the f32 accumulator,
    # the per-j bias path, and a leading batch dim that gets flattened.
    lead, batch2, dim2 = 2, 16, 1024
    x2 = jax.random.normal(k3, (lead, batch2, dim2), dtype=jnp.float32)
    w2, b2 = _make_params(k4, dim2)
    y2 = jax.block_until_ready(single_layer(x2, w2, b2, act="relu"))
    assert y2.shape == (lead, batch2, dim2)
    assert jnp.allclose(y2, reference(x2, w2, b2, "relu"), atol=5e-4, rtol=5e-4), \
        "relu multi-K mismatch vs reference"

    # Case 3: different fused activation (tanh) on the small shape.
    y3 = jax.block_until_ready(single_layer(x1, w1, b1, act="tanh"))
    assert jnp.allclose(y3, reference(x1, w1, b1, "tanh"), atol=5e-4, rtol=5e-4), \
        "tanh mismatch vs reference"

    print("KERNEL_OK")
</pallas_src>

<mosaic_0001>
module attributes {stable_mosaic.version = 11 : i64} {
  func.func @_fused_kernel(%arg0: i32, %arg1: i32, %arg2: memref<16x384xf32, #tpu.memory_space<vmem>>, %arg3: memref<384x384xf32, #tpu.memory_space<vmem>>, %arg4: memref<1x384xf32, #tpu.memory_space<vmem>>, %arg5: memref<16x384xf32, #tpu.memory_space<vmem>>) attributes {dimension_semantics = [#tpu.dimension_semantics<parallel>, #tpu.dimension_semantics<parallel>], iteration_bounds = array<i64: 1, 1>, scalar_prefetch = 0 : i64, scratch_operands = 0 : i64, tpu.core_type = #tpu.core_type<tc>, window_params = [{transform_indices = @transform_0, window_bounds = array<i64: 16, 384>}, {transform_indices = @transform_1, window_bounds = array<i64: 384, 384>}, {transform_indices = @transform_2, window_bounds = array<i64: 1, 384>}, {transform_indices = @transform_3, window_bounds = array<i64: 16, 384>}]} {
    %c0 = arith.constant 0 : index
    %c0_0 = arith.constant 0 : index
    %0 = vector.load %arg2[%c0, %c0_0] : memref<16x384xf32, #tpu.memory_space<vmem>>, vector<16x384xf32>
    %c0_1 = arith.constant 0 : index
    %c0_2 = arith.constant 0 : index
    %1 = vector.load %arg3[%c0_1, %c0_2] : memref<384x384xf32, #tpu.memory_space<vmem>>, vector<384x384xf32>
    %cst = arith.constant dense<0.000000e+00> : vector<16x384xf32>
    %2 = tpu.matmul %0, %1, %cst {dimension_numbers = #tpu.dot_dimension_numbers<[1], [1], [0], [0], [0, 0, 1, 0], [], []>} : vector<16x384xf32>, vector<384x384xf32>, vector<16x384xf32> -> vector<16x384xf32>
    %c0_3 = arith.constant 0 : index
    %c0_4 = arith.constant 0 : index
    %3 = vector.load %arg4[%c0_3, %c0_4] : memref<1x384xf32, #tpu.memory_space<vmem>>, vector<1x384xf32>
    %4 = vector.broadcast %3 : vector<1x384xf32> to vector<16x384xf32>
    %5 = arith.addf %2, %4 : vector<16x384xf32>
    %cst_5 = arith.constant 0.000000e+00 : f32
    %6 = vector.broadcast %cst_5 : f32 to vector<16x384xf32>
    %7 = arith.maximumf %5, %6 : vector<16x384xf32>
    %c0_6 = arith.constant 0 : index
    %c0_7 = arith.constant 0 : index
    %8 = vector.load %arg5[%c0_6, %c0_7] : memref<16x384xf32, #tpu.memory_space<vmem>>, vector<16x384xf32>
    tpu.vector_store %arg5[%c0_6, %c0_7], %7 {strides = array<i32>} : memref<16x384xf32, #tpu.memory_space<vmem>>, vector<16x384xf32>,
    return
  }
  func.func @transform_0(%arg0: i32, %arg1: i32) -> (i32, i32) {
    %c0_i32 = arith.constant 0 : i32
    %c0_i32_0 = arith.constant 0 : i32
    return %arg0, %c0_i32 : i32, i32
  }
  func.func @transform_1(%arg0: i32, %arg1: i32) -> (i32, i32) {
    %c0_i32 = arith.constant 0 : i32
    %c0_i32_0 = arith.constant 0 : i32
    return %arg1, %c0_i32 : i32, i32
  }
  func.func @transform_2(%arg0: i32, %arg1: i32) -> (i32, i32) {
    %c0_i32 = arith.constant 0 : i32
    %c0_i32_0 = arith.constant 0 : i32
    return %c0_i32, %arg1 : i32, i32
  }
  func.func @transform_3(%arg0: i32, %arg1: i32) -> (i32, i32) {
    %c0_i32 = arith.constant 0 : i32
    return %arg0, %arg1 : i32, i32
  }
}

</mosaic_0001>

<llo_original>
// kernel: single_layer.1
$region0: #{single_layer.1}
  #allocation0 [shape = 'u32[]', space=smem, size = 0x4, offset = 0x4, fixed_abs, tag = 'smem constant byte address 0x4 - core index']
  #allocation1 [shape = 'u32[144,128]{1,0:T(1,128)}', space=vmem, size = 0x12000, scoped, tag = 'internal scratch']
  %s0 = inlined_call_operand.hbm [shape: f32[16,384], index: 0, kind: input, shape index: {}]
  %s1 = inlined_call_operand.hbm [shape: f32[384,384], index: 1, kind: input, shape index: {}]
  %s2 = inlined_call_operand.vmem [shape: f32[1,384], index: 2, kind: input, shape index: {}]
  %s3 = inlined_call_operand.hbm [shape: f32[16,384], index: 3, kind: output, shape index: {}]
  %s4 = sld [smem:[#allocation0]]
  $region30: #{single_layer.1} parent=0
    _
  %s6 = ssub.s32 1, %s4
  %s7 = scalar_select 0, %s6, %s4
  $region1: #{single_layer.1} parent=0
    #allocation2 [shape = 'u8[24576]{0}', space=vmem, size = 0x6000, scoped, tag = 'input window, operand 0, single buffered']
    #allocation3 [shape = 's32[1]{0}', space=sflag, size = 0x4, scoped, tag = 'scoped memory for single_layer.1']
    #allocation4 [shape = 's32[1]{0}', space=sflag, size = 0x4, scoped, tag = 'scoped memory for single_layer.1']
    #allocation5 [shape = 'u8[589824]{0}', space=vmem, size = 0x90000, scoped, tag = 'input window, operand 1, single buffered']
    #allocation6 [shape = 's32[1]{0}', space=sflag, size = 0x4, scoped, tag = 'scoped memory for single_layer.1']
    #allocation7 [shape = 'u8[24576]{0}', space=vmem, size = 0x6000, scoped, tag = 'output window, operand 0, single buffered']
    %8 = vsyncpa [#allocation3], 0
    %9 = vsyncpa [#allocation6], 0
    %10 = vsyncpa [#allocation4], 0
    // Predicated region
    $region2: #{single_layer.1} parent=1 // pred_check
      _
    $region3: #{single_layer.1} parent=1 // pred_check_branch
      %12 = sbr.rel (0) target = $region5
    $region4: #{single_layer.1} parent=1 // pred_region
      %s14 = ssub.s32 768, 768
      %15 = vsyncadd [#allocation3], %s14
      %s16 = sshll.u32 [#allocation2], 4
      %s17 = int_to_ptr.vmem [resolvable:$true] %s16
      %22 = dma.hbm_to_vmem [thread:$0]  %s0, 768, %s17, [#allocation3], 384, 384, 24
    $region5: #{single_layer.1} parent=1 // pred_fallthru
      _
    // Predicated region
    $region6: #{single_layer.1} parent=1 // pred_check
      _
    $region7: #{single_layer.1} parent=1 // pred_check_branch
      %24 = sbr.rel (0) target = $region9
    $region8: #{single_layer.1} parent=1 // pred_region
      %s26 = ssub.s32 18432, 18432
      %27 = vsyncadd [#allocation6], %s26
      %s28 = sshll.u32 [#allocation5], 4
      %s29 = int_to_ptr.vmem [resolvable:$true] %s28
      %34 = dma.hbm_to_vmem [thread:$0]  %s1, 18432, %s29, [#allocation6], 384, 384, 24
    $region9: #{single_layer.1} parent=1 // pred_fallthru
      _
    // Predicated region
    $region10: #{single_layer.1} parent=1 // pred_check
      _
    $region11: #{single_layer.1} parent=1 // pred_check_branch
      %36 = sbr.rel (0) target = $region13
    $region12: #{single_layer.1} parent=1 // pred_region
      _
    $region13: #{single_layer.1} parent=1 // pred_fallthru
      _
    // Predicated region
    $region14: #{single_layer.1} parent=1 // pred_check
      _
    $region15: #{single_layer.1} parent=1 // pred_check_branch
      %38 = sbr.rel (0) target = $region17
    $region16: #{single_layer.1} parent=1 // pred_region
      %39 = dma.done [#allocation3], 768
    $region17: #{single_layer.1} parent=1 // pred_fallthru
      _
    // Predicated region
    $region18: #{single_layer.1} parent=1 // pred_check
      _
    $region19: #{single_layer.1} parent=1 // pred_check_branch
      %41 = sbr.rel (0) target = $region21
    $region20: #{single_layer.1} parent=1 // pred_region
      %42 = dma.done [#allocation6], 18432
    $region21: #{single_layer.1} parent=1 // pred_fallthru
      _
    %v43 = vld [vmem:[#allocation2] sm:$0xff]
    %v44 = vld [vmem:[#allocation2 + $0x8] sm:$0xff]
    %v45 = vld [vmem:[#allocation2 + $0x10] sm:$0xff]
    %v46 = vld [vmem:[#allocation2 + $0x18] sm:$0xff]
    %v47 = vld [vmem:[#allocation2 + $0x20] sm:$0xff]
    %v48 = vld [vmem:[#allocation2 + $0x28] sm:$0xff]
    %v49 = vld [vmem:[#allocation5] sm:$0xff]
    %v50 = vld [vmem:[#allocation5 + $0x8] sm:$0xff]
    %v51 = vld [vmem:[#allocation5 + $0x10] sm:$0xff]
    %v52 = vld [vmem:[#allocation5 + $0x18] sm:$0xff]
    %v53 = vld [vmem:[#allocation5 + $0x20] sm:$0xff]
    %v54 = vld [vmem:[#allocation5 + $0x28] sm:$0xff]
    %v55 = vld [vmem:[#allocation5 + $0x30] sm:$0xff]
    %v56 = vld [vmem:[#allocation5 + $0x38] sm:$0xff]
    %v57 = vld [vmem:[#allocation5 + $0x40] sm:$0xff]
    %v58 = vld [vmem:[#allocation5 + $0x48] sm:$0xff]
    %v59 = vld [vmem:[#allocation5 + $0x50] sm:$0xff]
    %v60 = vld [vmem:[#allocation5 + $0x58] sm:$0xff]
    %v61 = vld [vmem:[#allocation5 + $0x60] sm:$0xff]
    %v62 = vld [vmem:[#allocation5 + $0x68] sm:$0xff]
    %v63 = vld [vmem:[#allocation5 + $0x70] sm:$0xff]
    %v64 = vld [vmem:[#allocation5 + $0x78] sm:$0xff]
    %v65 = vld [vmem:[#allocation5 + $0x80] sm:$0xff]
    %v66 = vld [vmem:[#allocation5 + $0x88] sm:$0xff]
    %v67 = vld [vmem:[#allocation5 + $0x90] sm:$0xff]
    %v68 = vld [vmem:[#allocation5 + $0x98] sm:$0xff]
    %v69 = vld [vmem:[#allocation5 + $0xa0] sm:$0xff]
    %v70 = vld [vmem:[#allocation5 + $0xa8] sm:$0xff]
    %v71 = vld [vmem:[#allocation5 + $0xb0] sm:$0xff]
    %v72 = vld [vmem:[#allocation5 + $0xb8] sm:$0xff]
    %v73 = vld [vmem:[#allocation5 + $0xc0] sm:$0xff]
    %v74 = vld [vmem:[#allocation5 + $0xc8] sm:$0xff]
    %v75 = vld [vmem:[#allocation5 + $0xd0] sm:$0xff]
    %v76 = vld [vmem:[#allocation5 + $0xd8] sm:$0xff]
    %v77 = vld [vmem:[#allocation5 + $0xe0] sm:$0xff]
    %v78 = vld [vmem:[#allocation5 + $0xe8] sm:$0xff]
    %v79 = vld [vmem:[#allocation5 + $0xf0] sm:$0xff]
    %v80 = vld [vmem:[#allocation5 + $0xf8] sm:$0xff]
    %v81 = vld [vmem:[#allocation5 + $0x100] sm:$0xff]
    %v82 = vld [vmem:[#allocation5 + $0x108] sm:$0xff]
    %v83 = vld [vmem:[#allocation5 + $0x110] sm:$0xff]
    %v84 = vld [vmem:[#allocation5 + $0x118] sm:$0xff]
    %v85 = vld [vmem:[#allocation5 + $0x120] sm:$0xff]
    %v86 = vld [vmem:[#allocation5 + $0x128] sm:$0xff]
    %v87 = vld [vmem:[#allocation5 + $0x130] sm:$0xff]
    %v88 = vld [vmem:[#allocation5 + $0x138] sm:$0xff]
    %v89 = vld [vmem:[#allocation5 + $0x140] sm:$0xff]
    %v90 = vld [vmem:[#allocation5 + $0x148] sm:$0xff]
    %v91 = vld [vmem:[#allocation5 + $0x150] sm:$0xff]
    %v92 = vld [vmem:[#allocation5 + $0x158] sm:$0xff]
    %v93 = vld [vmem:[#allocation5 + $0x160] sm:$0xff]
    %v94 = vld [vmem:[#allocation5 + $0x168] sm:$0xff]
    %v95 = vld [vmem:[#allocation5 + $0x170] sm:$0xff]
    %v96 = vld [vmem:[#allocation5 + $0x178] sm:$0xff]
    %v97 = vld [vmem:[#allocation5 + $0x180] sm:$0xff]
    %v98 = vld [vmem:[#allocation5 + $0x188] sm:$0xff]
    %v99 = vld [vmem:[#allocation5 + $0x190] sm:$0xff]
    %v100 = vld [vmem:[#allocation5 + $0x198] sm:$0xff]
    %v101 = vld [vmem:[#allocation5 + $0x1a0] sm:$0xff]
    %v102 = vld [vmem:[#allocation5 + $0x1a8] sm:$0xff]
    %v103 = vld [vmem:[#allocation5 + $0x1b0] sm:$0xff]
    %v104 = vld [vmem:[#allocation5 + $0x1b8] sm:$0xff]
    %v105 = vld [vmem:[#allocation5 + $0x1c0] sm:$0xff]
    %v106 = vld [vmem:[#allocation5 + $0x1c8] sm:$0xff]
    %v107 = vld [vmem:[#allocation5 + $0x1d0] sm:$0xff]
    %v108 = vld [vmem:[#allocation5 + $0x1d8] sm:$0xff]
    %v109 = vld [vmem:[#allocation5 + $0x1e0] sm:$0xff]
    %v110 = vld [vmem:[#allocation5 + $0x1e8] sm:$0xff]
    %v111 = vld [vmem:[#allocation5 + $0x1f0] sm:$0xff]
    %v112 = vld [vmem:[#allocation5 + $0x1f8] sm:$0xff]
    %v113 = vld [vmem:[#allocation5 + $0x200] sm:$0xff]
    %v114 = vld [vmem:[#allocation5 + $0x208] sm:$0xff]
    %v115 = vld [vmem:[#allocation5 + $0x210] sm:$0xff]
    %v116 = vld [vmem:[#allocation5 + $0x218] sm:$0xff]
    %v117 = vld [vmem:[#allocation5 + $0x220] sm:$0xff]
    %v118 = vld [vmem:[#allocation5 + $0x228] sm:$0xff]
    %v119 = vld [vmem:[#allocation5 + $0x230] sm:$0xff]
    %v120 = vld [vmem:[#allocation5 + $0x238] sm:$0xff]
    %v121 = vld [vmem:[#allocation5 + $0x240] sm:$0xff]
    %v122 = vld [vmem:[#allocation5 + $0x248] sm:$0xff]
    %v123 = vld [vmem:[#allocation5 + $0x250] sm:$0xff]
    %v124 = vld [vmem:[#allocation5 + $0x258] sm:$0xff]
    %v125 = vld [vmem:[#allocation5 + $0x260] sm:$0xff]
    %v126 = vld [vmem:[#allocation5 + $0x268] sm:$0xff]
    %v127 = vld [vmem:[#allocation5 + $0x270] sm:$0xff]
    %v128 = vld [vmem:[#allocation5 + $0x278] sm:$0xff]
    %v129 = vld [vmem:[#allocation5 + $0x280] sm:$0xff]
    %v130 = vld [vmem:[#allocation5 + $0x288] sm:$0xff]
    %v131 = vld [vmem:[#allocation5 + $0x290] sm:$0xff]
    %v132 = vld [vmem:[#allocation5 + $0x298] sm:$0xff]
    %v133 = vld [vmem:[#allocation5 + $0x2a0] sm:$0xff]
    %v134 = vld [vmem:[#allocation5 + $0x2a8] sm:$0xff]
    %v135 = vld [vmem:[#allocation5 + $0x2b0] sm:$0xff]
    %v136 = vld [vmem:[#allocation5 + $0x2b8] sm:$0xff]
    %v137 = vld [vmem:[#allocation5 + $0x2c0] sm:$0xff]
    %v138 = vld [vmem:[#allocation5 + $0x2c8] sm:$0xff]
    %v139 = vld [vmem:[#allocation5 + $0x2d0] sm:$0xff]
    %v140 = vld [vmem:[#allocation5 + $0x2d8] sm:$0xff]
    %v141 = vld [vmem:[#allocation5 + $0x2e0] sm:$0xff]
    %v142 = vld [vmem:[#allocation5 + $0x2e8] sm:$0xff]
    %v143 = vld [vmem:[#allocation5 + $0x2f0] sm:$0xff]
    %v144 = vld [vmem:[#allocation5 + $0x2f8] sm:$0xff]
    %v145 = vld [vmem:[#allocation5 + $0x300] sm:$0xff]
    %v146 = vld [vmem:[#allocation5 + $0x308] sm:$0xff]
    %v147 = vld [vmem:[#allocation5 + $0x310] sm:$0xff]
    %v148 = vld [vmem:[#allocation5 + $0x318] sm:$0xff]
    %v149 = vld [vmem:[#allocation5 + $0x320] sm:$0xff]
    %v150 = vld [vmem:[#allocation5 + $0x328] sm:$0xff]
    %v151 = vld [vmem:[#allocation5 + $0x330] sm:$0xff]
    %v152 = vld [vmem:[#allocation5 + $0x338] sm:$0xff]
    %v153 = vld [vmem:[#allocation5 + $0x340] sm:$0xff]
    %v154 = vld [vmem:[#allocation5 + $0x348] sm:$0xff]
    %v155 = vld [vmem:[#allocation5 + $0x350] sm:$0xff]
    %v156 = vld [vmem:[#allocation5 + $0x358] sm:$0xff]
    %v157 = vld [vmem:[#allocation5 + $0x360] sm:$0xff]
    %v158 = vld [vmem:[#allocation5 + $0x368] sm:$0xff]
    %v159 = vld [vmem:[#allocation5 + $0x370] sm:$0xff]
    %v160 = vld [vmem:[#allocation5 + $0x378] sm:$0xff]
    %v161 = vld [vmem:[#allocation5 + $0x380] sm:$0xff]
    %v162 = vld [vmem:[#allocation5 + $0x388] sm:$0xff]
    %v163 = vld [vmem:[#allocation5 + $0x390] sm:$0xff]
    %v164 = vld [vmem:[#allocation5 + $0x398] sm:$0xff]
    %v165 = vld [vmem:[#allocation5 + $0x3a0] sm:$0xff]
    %v166 = vld [vmem:[#allocation5 + $0x3a8] sm:$0xff]
    %v167 = vld [vmem:[#allocation5 + $0x3b0] sm:$0xff]
    %v168 = vld [vmem:[#allocation5 + $0x3b8] sm:$0xff]
    %v169 = vld [vmem:[#allocation5 + $0x3c0] sm:$0xff]
    %v170 = vld [vmem:[#allocation5 + $0x3c8] sm:$0xff]
    %v171 = vld [vmem:[#allocation5 + $0x3d0] sm:$0xff]
    %v172 = vld [vmem:[#allocation5 + $0x3d8] sm:$0xff]
    %v173 = vld [vmem:[#allocation5 + $0x3e0] sm:$0xff]
    %v174 = vld [vmem:[#allocation5 + $0x3e8] sm:$0xff]
    %v175 = vld [vmem:[#allocation5 + $0x3f0] sm:$0xff]
    %v176 = vld [vmem:[#allocation5 + $0x3f8] sm:$0xff]
    %v177 = vld [vmem:[#allocation5 + $0x400] sm:$0xff]
    %v178 = vld [vmem:[#allocation5 + $0x408] sm:$0xff]
    %v179 = vld [vmem:[#allocation5 + $0x410] sm:$0xff]
    %v180 = vld [vmem:[#allocation5 + $0x418] sm:$0xff]
    %v181 = vld [vmem:[#allocation5 + $0x420] sm:$0xff]
    %v182 = vld [vmem:[#allocation5 + $0x428] sm:$0xff]
    %v183 = vld [vmem:[#allocation5 + $0x430] sm:$0xff]
    %v184 = vld [vmem:[#allocation5 + $0x438] sm:$0xff]
    %v185 = vld [vmem:[#allocation5 + $0x440] sm:$0xff]
    %v186 = vld [vmem:[#allocation5 + $0x448] sm:$0xff]
    %v187 = vld [vmem:[#allocation5 + $0x450] sm:$0xff]
    %v188 = vld [vmem:[#allocation5 + $0x458] sm:$0xff]
    %v189 = vld [vmem:[#allocation5 + $0x460] sm:$0xff]
    %v190 = vld [vmem:[#allocation5 + $0x468] sm:$0xff]
    %v191 = vld [vmem:[#allocation5 + $0x470] sm:$0xff]
    %v192 = vld [vmem:[#allocation5 + $0x478] sm:$0xff]
    %v193 = vld [vmem:[%s2] sm:$0x7]
    %v195 = vlaneseq
    %v196 = vshrl.u32 %v195, 7
    %v197 = vsub.s32 0, %v196
    %v198 = vrot.slane %v193, %v197
    %v199 = vlaneseq
    %v200 = vshrl.u32 %v199, 7
    %v201 = vsub.s32 1, %v200
    %v202 = vrot.slane %v193, %v201
    %v203 = vlaneseq
    %v204 = vshrl.u32 %v203, 7
    %v205 = vsub.s32 2, %v204
    %v206 = vrot.slane %v193, %v205
    %210 = vmatprep.subr.mxu0 %v50
    %211 = vmatpush1.xpose.msra.mxu0 %v49
    %212 = vmatprep.subr.mxu0 %v53
    %213 = vmatpush1.xpose.msra.mxu0 %v52
    %214 = vmatprep.subr.mxu0 %v56
    %215 = vmatpush1.xpose.msra.mxu0 %v55
    %216 = vmatprep.subr.mxu0 %v59
    %217 = vmatpush1.xpose.msra.mxu0 %v58
    %218 = vmatprep.subr.mxu0 %v62
    %219 = vmatpush1.xpose.msra.mxu0 %v61
    %220 = vmatprep.subr.mxu0 %v65
    %221 = vmatpush1.xpose.msra.mxu0 %v64
    %222 = vmatprep.subr.mxu0 %v68
    %223 = vmatpush1.xpose.msra.mxu0 %v67
    %224 = vmatprep.subr.mxu0 %v71
    %225 = vmatpush1.xpose.msra.mxu0 %v70
    %226 = vmatprep.subr.mxu0 %v74
    %227 = vmatpush1.xpose.msra.mxu0 %v73
    %228 = vmatprep.subr.mxu0 %v77
    %229 = vmatpush1.xpose.msra.mxu0 %v76
    %230 = vmatprep.subr.mxu0 %v80
    %231 = vmatpush1.xpose.msra.mxu0 %v79
    %232 = vmatprep.subr.mxu0 %v83
    %233 = vmatpush1.xpose.msra.mxu0 %v82
    %234 = vmatprep.subr.mxu0 %v86
    %235 = vmatpush1.xpose.msra.mxu0 %v85
    %236 = vmatprep.subr.mxu0 %v89
    %237 = vmatpush1.xpose.msra.mxu0 %v88
    %238 = vmatprep.subr.mxu0 %v92
    %239 = vmatpush1.xpose.msra.mxu0 %v91
    %240 = vmatprep.subr.mxu0 %v95
    %241 = vmatpush1.xpose.msra.mxu0 %v94
    %242 = vmatprep.subr.mxu0 %v98
    %243 = vmatpush1.xpose.msra.mxu0 %v97
    %244 = vmatprep.subr.mxu0 %v101
    %245 = vmatpush1.xpose.msra.mxu0 %v100
    %246 = vmatprep.subr.mxu0 %v104
    %247 = vmatpush1.xpose.msra.mxu0 %v103
    %248 = vmatprep.subr.mxu0 %v107
    %249 = vmatpush1.xpose.msra.mxu0 %v106
    %250 = vmatprep.subr.mxu0 %v110
    %251 = vmatpush1.xpose.msra.mxu0 %v109
    %252 = vmatprep.subr.mxu0 %v113
    %253 = vmatpush1.xpose.msra.mxu0 %v112
    %254 = vmatprep.subr.mxu0 %v116
    %255 = vmatpush1.xpose.msra.mxu0 %v115
    %256 = vmatprep.subr.mxu0 %v119
    %257 = vmatpush1.xpose.msra.mxu0 %v118
    %258 = vmatprep.subr.mxu0 %v122
    %259 = vmatpush1.xpose.msra.mxu0 %v121
    %260 = vmatprep.subr.mxu0 %v125
    %261 = vmatpush1.xpose.msra.mxu0 %v124
    %262 = vmatprep.subr.mxu0 %v128
    %263 = vmatpush1.xpose.msra.mxu0 %v127
    %264 = vmatprep.subr.mxu0 %v131
    %265 = vmatpush1.xpose.msra.mxu0 %v130
    %266 = vmatprep.subr.mxu0 %v134
    %267 = vmatpush1.xpose.msra.mxu0 %v133
    %268 = vmatprep.subr.mxu0 %v137
    %269 = vmatpush1.xpose.msra.mxu0 %v136
    %270 = vmatprep.subr.mxu0 %v140
    %271 = vmatpush1.xpose.msra.mxu0 %v139
    %272 = vmatprep.subr.mxu0 %v143
    %273 = vmatpush1.xpose.msra.mxu0 %v142
    %274 = vmatprep.mubr.f32.mxu0 %v44
    %275 = vmatmul.mubr.f32.gmra.mrb[0].mxu0 %v43
    %v276 = vpop.f32.mrb[0].mxu0
    %v277 = vadd.f32 %v198, %v276
    %v278 = vpop.f32.mrb[0].mxu0
    %v279 = vadd.f32 %v202, %v278
    %280 = vmatprep.mubr.f32.mxu0 %v47
    %281 = vmatmul.mubr.f32.gmra.mrb[0].mxu0 %v46
    %v282 = vpop.f32.mrb[0].mxu0
    %v283 = vadd.f32 %v198, %v282
    %v284 = vpop.f32.mrb[0].mxu0
    %v285 = vadd.f32 %v202, %v284
    %286 = vdwg.mxu0
    %287 = vmatprep.subr.mxu0 0.0
    %288 = vmatpush1.xpose.msra.mxu0 %v51
    %289 = vmatprep.subr.mxu0 0.0
    %290 = vmatpush1.xpose.msra.mxu0 %v54
    %291 = vmatprep.subr.mxu0 0.0
    %292 = vmatpush1.xpose.msra.mxu0 %v57
    %293 = vmatprep.subr.mxu0 0.0
    %294 = vmatpush1.xpose.msra.mxu0 %v60
    %295 = vmatprep.subr.mxu0 0.0
    %296 = vmatpush1.xpose.msra.mxu0 %v63
    %297 = vmatprep.subr.mxu0 0.0
    %298 = vmatpush1.xpose.msra.mxu0 %v66
    %299 = vmatprep.subr.mxu0 0.0
    %300 = vmatpush1.xpose.msra.mxu0 %v69
    %301 = vmatprep.subr.mxu0 0.0
    %302 = vmatpush1.xpose.msra.mxu0 %v72
    %303 = vmatprep.subr.mxu0 0.0
    %304 = vmatpush1.xpose.msra.mxu0 %v75
    %305 = vmatprep.subr.mxu0 0.0
    %306 = vmatpush1.xpose.msra.mxu0 %v78
    %307 = vmatprep.subr.mxu0 0.0
    %308 = vmatpush1.xpose.msra.mxu0 %v81
    %309 = vmatprep.subr.mxu0 0.0
    %310 = vmatpush1.xpose.msra.mxu0 %v84
    %311 = vmatprep.subr.mxu0 0.0
    %312 = vmatpush1.xpose.msra.mxu0 %v87
    %313 = vmatprep.subr.mxu0 0.0
    %314 = vmatpush1.xpose.msra.mxu0 %v90
    %315 = vmatprep.subr.mxu0 0.0
    %316 = vmatpush1.xpose.msra.mxu0 %v93
    %317 = vmatprep.subr.mxu0 0.0
    %318 = vmatpush1.xpose.msra.mxu0 %v96
    %319 = vmatprep.subr.mxu0 0.0
    %320 = vmatpush1.xpose.msra.mxu0 %v99
    %321 = vmatprep.subr.mxu0 0.0
    %322 = vmatpush1.xpose.msra.mxu0 %v102
    %323 = vmatprep.subr.mxu0 0.0
    %324 = vmatpush1.xpose.msra.mxu0 %v105
    %325 = vmatprep.subr.mxu0 0.0
    %326 = vmatpush1.xpose.msra.mxu0 %v108
    %327 = vmatprep.subr.mxu0 0.0
    %328 = vmatpush1.xpose.msra.mxu0 %v111
    %329 = vmatprep.subr.mxu0 0.0
    %330 = vmatpush1.xpose.msra.mxu0 %v114
    %331 = vmatprep.subr.mxu0 0.0
    %332 = vmatpush1.xpose.msra.mxu0 %v117
    %333 = vmatprep.subr.mxu0 0.0
    %334 = vmatpush1.xpose.msra.mxu0 %v120
    %335 = vmatprep.subr.mxu0 0.0
    %336 = vmatpush1.xpose.msra.mxu0 %v123
    %337 = vmatprep.subr.mxu0 0.0
    %338 = vmatpush1.xpose.msra.mxu0 %v126
    %339 = vmatprep.subr.mxu0 0.0
    %340 = vmatpush1.xpose.msra.mxu0 %v129
    %341 = vmatprep.subr.mxu0 0.0
    %342 = vmatpush1.xpose.msra.mxu0 %v132
    %343 = vmatprep.subr.mxu0 0.0
    %344 = vmatpush1.xpose.msra.mxu0 %v135
    %345 = vmatprep.subr.mxu0 0.0
    %346 = vmatpush1.xpose.msra.mxu0 %v138
    %347 = vmatprep.subr.mxu0 0.0
    %348 = vmatpush1.xpose.msra.mxu0 %v141
    %349 = vmatprep.subr.mxu0 0.0
    %350 = vmatpush1.xpose.msra.mxu0 %v144
    %351 = vmatprep.mubr.f32.mxu0 0.0
    %352 = vmatmul.mubr.f32.gmra.mrb[0].mxu0 %v45
    %v353 = vpop.f32.mrb[0].mxu0
    %v354 = vadd.f32 %v277, %v353
    %v355 = vpop.f32.mrb[0].mxu0
    %v356 = vadd.f32 %v279, %v355
    %357 = vmatprep.mubr.f32.mxu0 0.0
    %358 = vmatmul.mubr.f32.gmra.mrb[0].mxu0 %v48
    %v359 = vpop.f32.mrb[0].mxu0
    %v360 = vadd.f32 %v283, %v359
    %v361 = vpop.f32.mrb[0].mxu0
    %v362 = vadd.f32 %v285, %v361
    %363 = vdwg.mxu0
    %364 = vmatprep.subr.mxu0 %v146
    %365 = vmatpush1.xpose.msra.mxu0 %v145
    %366 = vmatprep.subr.mxu0 %v149
    %367 = vmatpush1.xpose.msra.mxu0 %v148
    %368 = vmatprep.subr.mxu0 %v152
    %369 = vmatpush1.xpose.msra.mxu0 %v151
    %370 = vmatprep.subr.mxu0 %v155
    %371 = vmatpush1.xpose.msra.mxu0 %v154
    %372 = vmatprep.subr.mxu0 %v158
    %373 = vmatpush1.xpose.msra.mxu0 %v157
    %374 = vmatprep.subr.mxu0 %v161
    %375 = vmatpush1.xpose.msra.mxu0 %v160
    %376 = vmatprep.subr.mxu0 %v164
    %377 = vmatpush1.xpose.msra.mxu0 %v163
    %378 = vmatprep.subr.mxu0 %v167
    %379 = vmatpush1.xpose.msra.mxu0 %v166
    %380 = vmatprep.subr.mxu0 %v170
    %381 = vmatpush1.xpose.msra.mxu0 %v169
    %382 = vmatprep.subr.mxu0 %v173
    %383 = vmatpush1.xpose.msra.mxu0 %v172
    %384 = vmatprep.subr.mxu0 %v176
    %385 = vmatpush1.xpose.msra.mxu0 %v175
    %386 = vmatprep.subr.mxu0 %v179
    %387 = vmatpush1.xpose.msra.mxu0 %v178
    %388 = vmatprep.subr.mxu0 %v182
    %389 = vmatpush1.xpose.msra.mxu0 %v181
    %390 = vmatprep.subr.mxu0 %v185
    %391 = vmatpush1.xpose.msra.mxu0 %v184
    %392 = vmatprep.subr.mxu0 %v188
    %393 = vmatpush1.xpose.msra.mxu0 %v187
    %394 = vmatprep.subr.mxu0 %v191
    %395 = vmatpush1.xpose.msra.mxu0 %v190
    %396 = vmatprep.subr.mxu0 0.0
    %397 = vmatpush1.xpose.msra.mxu0 0.0
    %398 = vmatprep.subr.mxu0 0.0
    %399 = vmatpush1.xpose.msra.mxu0 0.0
    %400 = vmatprep.subr.mxu0 0.0
    %401 = vmatpush1.xpose.msra.mxu0 0.0
    %402 = vmatprep.subr.mxu0 0.0
    %403 = vmatpush1.xpose.msra.mxu0 0.0
    %404 = vmatprep.subr.mxu0 0.0
    %405 = vmatpush1.xpose.msra.mxu0 0.0
    %406 = vmatprep.subr.mxu0 0.0
    %407 = vmatpush1.xpose.msra.mxu0 0.0
    %408 = vmatprep.subr.mxu0 0.0
    %409 = vmatpush1.xpose.msra.mxu0 0.0
    %410 = vmatprep.subr.mxu0 0.0
    %411 = vmatpush1.xpose.msra.mxu0 0.0
    %412 = vmatprep.subr.mxu0 0.0
    %413 = vmatpush1.xpose.msra.mxu0 0.0
    %414 = vmatprep.subr.mxu0 0.0
    %415 = vmatpush1.xpose.msra.mxu0 0.0
    %416 = vmatprep.subr.mxu0 0.0
    %417 = vmatpush1.xpose.msra.mxu0 0.0
    %418 = vmatprep.subr.mxu0 0.0
    %419 = vmatpush1.xpose.msra.mxu0 0.0
    %420 = vmatprep.subr.mxu0 0.0
    %421 = vmatpush1.xpose.msra.mxu0 0.0
    %422 = vmatprep.subr.mxu0 0.0
    %423 = vmatpush1.xpose.msra.mxu0 0.0
    %424 = vmatprep.subr.mxu0 0.0
    %425 = vmatpush1.xpose.msra.mxu0 0.0
    %426 = vmatprep.subr.mxu0 0.0
    %427 = vmatpush1.xpose.msra.mxu0 0.0
    %428 = vmatprep.mubr.f32.mxu0 %v44
    %429 = vmatmul.mubr.f32.gmra.mrb[0].mxu0 %v43
    %v430 = vpop.f32.mrb[0].mxu0
    %v431 = vadd.f32 %v206, %v430
    %v432 = vpop.f32.mrb[0].mxu0
    %433 = vmatprep.mubr.f32.mxu0 %v47
    %434 = vmatmul.mubr.f32.gmra.mrb[0].mxu0 %v46
    %v435 = vpop.f32.mrb[0].mxu0
    %v436 = vadd.f32 %v206, %v435
    %v437 = vpop.f32.mrb[0].mxu0
    %438 = vdwg.mxu0
    %439 = vmatprep.subr.mxu0 0.0
    %440 = vmatpush1.xpose.msra.mxu0 %v147
    %441 = vmatprep.subr.mxu0 0.0
    %442 = vmatpush1.xpose.msra.mxu0 %v150
    %443 = vmatprep.subr.mxu0 0.0
    %444 = vmatpush1.xpose.msra.mxu0 %v153
    %445 = vmatprep.subr.mxu0 0.0
    %446 = vmatpush1.xpose.msra.mxu0 %v156
    %447 = vmatprep.subr.mxu0 0.0
    %448 = vmatpush1.xpose.msra.mxu0 %v159
    %449 = vmatprep.subr.mxu0 0.0
    %450 = vmatpush1.xpose.msra.mxu0 %v162
    %451 = vmatprep.subr.mxu0 0.0
    %452 = vmatpush1.xpose.msra.mxu0 %v165
    %453 = vmatprep.subr.mxu0 0.0
    %454 = vmatpush1.xpose.msra.mxu0 %v168
    %455 = vmatprep.subr.mxu0 0.0
    %456 = vmatpush1.xpose.msra.mxu0 %v171
    %457 = vmatprep.subr.mxu0 0.0
    %458 = vmatpush1.xpose.msra.mxu0 %v174
    %459 = vmatprep.subr.mxu0 0.0
    %460 = vmatpush1.xpose.msra.mxu0 %v177
    %461 = vmatprep.subr.mxu0 0.0
    %462 = vmatpush1.xpose.msra.mxu0 %v180
    %463 = vmatprep.subr.mxu0 0.0
    %464 = vmatpush1.xpose.msra.mxu0 %v183
    %465 = vmatprep.subr.mxu0 0.0
    %466 = vmatpush1.xpose.msra.mxu0 %v186
    %467 = vmatprep.subr.mxu0 0.0
    %468 = vmatpush1.xpose.msra.mxu0 %v189
    %469 = vmatprep.subr.mxu0 0.0
    %470 = vmatpush1.xpose.msra.mxu0 %v192
    %471 = vmatprep.subr.mxu0 0.0
    %472 = vmatpush1.xpose.msra.mxu0 0.0
    %473 = vmatprep.subr.mxu0 0.0
    %474 = vmatpush1.xpose.msra.mxu0 0.0
    %475 = vmatprep.subr.mxu0 0.0
    %476 = vmatpush1.xpose.msra.mxu0 0.0
    %477 = vmatprep.subr.mxu0 0.0
    %478 = vmatpush1.xpose.msra.mxu0 0.0
    %479 = vmatprep.subr.mxu0 0.0
    %480 = vmatpush1.xpose.msra.mxu0 0.0
    %481 = vmatprep.subr.mxu0 0.0
    %482 = vmatpush1.xpose.msra.mxu0 0.0
    %483 = vmatprep.subr.mxu0 0.0
    %484 = vmatpush1.xpose.msra.mxu0 0.0
    %485 = vmatprep.subr.mxu0 0.0
    %486 = vmatpush1.xpose.msra.mxu0 0.0
    %487 = vmatprep.subr.mxu0 0.0
    %488 = vmatpush1.xpose.msra.mxu0 0.0
    %489 = vmatprep.subr.mxu0 0.0
    %490 = vmatpush1.xpose.msra.mxu0 0.0
    %491 = vmatprep.subr.mxu0 0.0
    %492 = vmatpush1.xpose.msra.mxu0 0.0
    %493 = vmatprep.subr.mxu0 0.0
    %494 = vmatpush1.xpose.msra.mxu0 0.0
    %495 = vmatprep.subr.mxu0 0.0
    %496 = vmatpush1.xpose.msra.mxu0 0.0
    %497 = vmatprep.subr.mxu0 0.0
    %498 = vmatpush1.xpose.msra.mxu0 0.0
    %499 = vmatprep.subr.mxu0 0.0
    %500 = vmatpush1.xpose.msra.mxu0 0.0
    %501 = vmatprep.subr.mxu0 0.0
    %502 = vmatpush1.xpose.msra.mxu0 0.0
    %503 = vmatprep.mubr.f32.mxu0 0.0
    %504 = vmatmul.mubr.f32.gmra.mrb[0].mxu0 %v45
    %v505 = vpop.f32.mrb[0].mxu0
    %v506 = vadd.f32 %v431, %v505
    %v507 = vpop.f32.mrb[0].mxu0
    %508 = vmatprep.mubr.f32.mxu0 0.0
    %509 = vmatmul.mubr.f32.gmra.mrb[0].mxu0 %v48
    %v510 = vpop.f32.mrb[0].mxu0
    %v511 = vadd.f32 %v436, %v510
    %v512 = vpop.f32.mrb[0].mxu0
    %513 = vdwg.mxu0
    %v514 = vmax.f32 %v354, 0.0
    %v515 = vmax.f32 %v356, 0.0
    %v516 = vmax.f32 %v506, 0.0
    %v517 = vmax.f32 %v360, 0.0
    %v518 = vmax.f32 %v362, 0.0
    %v519 = vmax.f32 %v511, 0.0
    %520 = vst [vmem:[#allocation7] sm:$0xff] %v514
    %521 = vst [vmem:[#allocation7 + $0x8] sm:$0xff] %v515
    %522 = vst [vmem:[#allocation7 + $0x10] sm:$0xff] %v516
    %523 = vst [vmem:[#allocation7 + $0x18] sm:$0xff] %v517
    %524 = vst [vmem:[#allocation7 + $0x20] sm:$0xff] %v518
    %525 = vst [vmem:[#allocation7 + $0x28] sm:$0xff] %v519
    // Predicated region
    $region22: #{single_layer.1} parent=1 // pred_check
      _
    $region23: #{single_layer.1} parent=1 // pred_check_branch
      %527 = sbr.rel (0) target = $region25
    $region24: #{single_layer.1} parent=1 // pred_region
      %s529 = ssub.s32 768, 768
      %530 = vsyncadd [#allocation4], %s529
      %s531 = sshll.u32 [#allocation7], 4
      %s532 = int_to_ptr.vmem [resolvable:$true] %s531
      %537 = dma.vmem_to_hbm [thread:$0]  %s532, 768, %s3, [#allocation4], 384, 384, 24
    $region25: #{single_layer.1} parent=1 // pred_fallthru
      _
    // Predicated region
    $region26: #{single_layer.1} parent=1 // pred_check
      _
    $region27: #{single_layer.1} parent=1 // pred_check_branch
      %539 = sbr.rel (0) target = $region29
    $region28: #{single_layer.1} parent=1 // pred_region
      %540 = dma.done [#allocation4], 768
    $region29: #{single_layer.1} parent=1 // pred_fallthru
      _
    %541 = vsyncpa [#allocation3], 1
    %542 = vsyncpa [#allocation6], 1
    %543 = vsyncpa [#allocation4], 1

</llo_original>
